<compile_context>
chip_gen: v5e
topology: v5e:2x2
jax: 0.10.0
libtpu: 0.0.40
codegen_flags: <defaults>
</compile_context>

<pallas_src>
import jax
import jax.numpy as jnp
from jax.experimental import pallas as pl
from jax.experimental.pallas import tpu as pltpu

LANES = 128
ACC_ROWS = 256           # 256 * 128 * 4 B = 128 KiB accumulator slab
MAX_TILE_ROWS = 4096     # 4096 * 128 * 4 B = 2 MiB per f32 input tile


def _make_euclid_kernel(tile_rows, acc_rows, num_tiles, last_rows):
    """Build a kernel specialized on trace-time constants (no scalar prefetch)."""
    fold = tile_rows // acc_rows
    assert fold * acc_rows == tile_rows

    def _fold_sum(v):
        # Leading-axis fold onto the small accumulator slab: layout-preserving
        # reshape + elementwise adds (VPU only, no XLU, no relayout copy).
        if fold == 1:
            return v
        return v.reshape(fold, acc_rows, LANES).sum(axis=0)

    def kernel(x_ref, y_ref, out_ref, acc_ref):
        j = pl.program_id(0)

        @pl.when(j == 0)
        def _init():
            acc_ref[...] = jnp.zeros_like(acc_ref)

        d = x_ref[...].astype(jnp.float32) - y_ref[...].astype(jnp.float32)
        sq = d * d

        if last_rows == tile_rows:
            # Every tile is full: steady-state body is pure sub/mul/accumulate.
            acc_ref[...] += _fold_sum(sq)
        else:
            # Only the last (partial) tile pays the mask; all other steps run
            # the bare hot loop.
            @pl.when(j < num_tiles - 1)
            def _hot():
                acc_ref[...] += _fold_sum(sq)

            @pl.when(j == num_tiles - 1)
            def _tail():
                # Rows >= last_rows hold stale/undefined VMEM (clipped DMA);
                # zero them before accumulating (select also kills any NaN/Inf).
                row = jax.lax.broadcasted_iota(jnp.int32, sq.shape, 0)
                acc_ref[...] += _fold_sum(jnp.where(row < last_rows, sq, 0.0))

        @pl.when(j == num_tiles - 1)
        def _finalize():
            # Sublane reduce only; the 128-lane reduce + sqrt happen in the
            # wrapper (keeps the output lane-dense and the in-kernel XLU work
            # to a single pass).
            out_ref[...] = jnp.sum(acc_ref[...], axis=0, keepdims=True)

    return kernel


def euclidean_distance_loss(x, labels, *, max_tile_rows=MAX_TILE_ROWS):
    assert x.shape == labels.shape, "x and labels must have the same shape"

    xf = x.reshape(-1)
    yf = labels.reshape(-1)
    n = int(xf.shape[0])

    if n == 0:
        return jnp.float32(0.0)

    rows_full = n // LANES
    n_aligned = rows_full * LANES

    # <128-element ragged tail: plain jnp in the wrapper (avoids a jnp.pad
    # full-array copy and any in-kernel lane masking).
    tail_sq = jnp.float32(0.0)
    if n_aligned < n:
        dt = xf[n_aligned:].astype(jnp.float32) - yf[n_aligned:].astype(jnp.float32)
        tail_sq = jnp.sum(dt * dt)

    if rows_full == 0:
        return jnp.sqrt(tail_sq)

    # Lane-dense (rows, 128) views of the aligned prefix (contiguous: free).
    x2 = xf[:n_aligned].reshape(rows_full, LANES)
    y2 = yf[:n_aligned].reshape(rows_full, LANES)

    # Tile sizing: full extent for small inputs (any row count is legal as a
    # full-dim block), else a large multiple of 8.
    max_tile_rows = max(8, (int(max_tile_rows) // 8) * 8)
    tile_rows = rows_full if rows_full <= max_tile_rows else max_tile_rows
    num_tiles = pl.cdiv(rows_full, tile_rows)
    last_rows = rows_full - (num_tiles - 1) * tile_rows

    # Small fixed accumulator when the tile folds evenly; otherwise (only for
    # single-tile small/odd inputs) fall back to a tile-sized acc, fold = 1.
    acc_rows = ACC_ROWS if tile_rows % ACC_ROWS == 0 else tile_rows

    kernel = _make_euclid_kernel(tile_rows, acc_rows, num_tiles, last_rows)

    in_itemsize = x.dtype.itemsize + labels.dtype.itemsize
    cost = pl.CostEstimate(
        flops=3 * n_aligned,
        transcendentals=0,
        bytes_accessed=n_aligned * in_itemsize + LANES * 4,
    )

    # VMEM budget: 2 pipeline buffers x (one tile of each input) + acc + slack.
    tile_vmem = tile_rows * LANES * in_itemsize
    acc_vmem = acc_rows * LANES * 4
    vmem_limit = int(min(32 << 20, max(16 << 20, 2 * tile_vmem + acc_vmem + (4 << 20))))

    partial = pl.pallas_call(
        kernel,
        out_shape=jax.ShapeDtypeStruct((1, LANES), jnp.float32),
        grid_spec=pltpu.PrefetchScalarGridSpec(
            num_scalar_prefetch=0,
            grid=(num_tiles,),
            in_specs=[
                pl.BlockSpec((tile_rows, LANES), lambda j: (j, 0)),
                pl.BlockSpec((tile_rows, LANES), lambda j: (j, 0)),
            ],
            out_specs=pl.BlockSpec((1, LANES), lambda j: (0, 0)),
            scratch_shapes=[pltpu.VMEM((acc_rows, LANES), jnp.float32)],
        ),
        compiler_params=pltpu.CompilerParams(
            dimension_semantics=("arbitrary",),
            vmem_limit_bytes=vmem_limit,
        ),
        cost_estimate=cost,
    )(x2, y2)

    # Final 128-lane reduce, ragged-tail add, and sqrt in the wrapper.
    return jnp.sqrt(jnp.sum(partial) + tail_sq)


if __name__ == "__main__":
    key = jax.random.PRNGKey(0)
    kx, ky = jax.random.split(key)

    # Small shape consistent with the module (elementwise over any shape).
    shape = (2, 4, 16, 16)
    x = jax.random.normal(kx, shape, dtype=jnp.float32)
    labels = jax.random.normal(ky, shape, dtype=jnp.float32)
    loss = euclidean_distance_loss(x, labels)
    jax.block_until_ready(loss)
    ref = jnp.sqrt(jnp.sum((x - labels) ** 2))
    assert jnp.allclose(loss, ref, rtol=1e-5, atol=1e-5), (loss, ref)

    # Ragged size: aligned prefix in-kernel + <128-element tail in the wrapper.
    shape2 = (3, 7, 19)  # 399 elements = 3 full 128-lane rows + 15-elem tail
    x2 = jax.random.normal(kx, shape2, dtype=jnp.float32)
    y2 = jax.random.normal(ky, shape2, dtype=jnp.float32)
    loss2 = euclidean_distance_loss(x2, y2)
    jax.block_until_ready(loss2)
    ref2 = jnp.sqrt(jnp.sum((x2 - y2) ** 2))
    assert jnp.allclose(loss2, ref2, rtol=1e-5, atol=1e-5), (loss2, ref2)

    # Multi-tile path with a partial (masked) last tile, forced via tiny tiles.
    shape3 = (20, 128)  # 20 rows; tile_rows=8 -> 3 tiles, last tile has 4 rows
    x3 = jax.random.normal(kx, shape3, dtype=jnp.float32)
    y3 = jax.random.normal(ky, shape3, dtype=jnp.float32)
    loss3 = euclidean_distance_loss(x3, y3, max_tile_rows=8)
    jax.block_until_ready(loss3)
    ref3 = jnp.sqrt(jnp.sum((x3 - y3) ** 2))
    assert jnp.allclose(loss3, ref3, rtol=1e-5, atol=1e-5), (loss3, ref3)

    print("KERNEL_OK")
</pallas_src>

<mosaic_0001>
module attributes {stable_mosaic.version = 11 : i64} {
  func.func @kernel(%arg0: i32, %arg1: memref<16x128xf32, #tpu.memory_space<vmem>>, %arg2: memref<16x128xf32, #tpu.memory_space<vmem>>, %arg3: memref<1x128xf32, #tpu.memory_space<vmem>>, %arg4: memref<16x128xf32, #tpu.memory_space<vmem>>) attributes {dimension_semantics = [#tpu.dimension_semantics<arbitrary>], iteration_bounds = array<i64: 1>, scalar_prefetch = 0 : i64, scratch_operands = 1 : i64, tpu.core_type = #tpu.core_type<tc>, window_params = [{transform_indices = @transform_0, window_bounds = array<i64: 16, 128>}, {transform_indices = @transform_1, window_bounds = array<i64: 16, 128>}, {pipeline_mode = #tpu.pipeline_mode<synchronous>, transform_indices = @transform_2, window_bounds = array<i64: 1, 128>}]} {
    %c0_i32 = arith.constant 0 : i32
    %0 = arith.cmpi eq, %arg0, %c0_i32 : i32
    %1 = arith.extui %0 : i1 to i32
    %c0_i32_0 = arith.constant 0 : i32
    %2 = arith.cmpi ne, %1, %c0_i32_0 : i32
    scf.if %2 {
      %cst = arith.constant 0.000000e+00 : f32
      %13 = vector.broadcast %cst : f32 to vector<16x128xf32>
      %c0_10 = arith.constant 0 : index
      %c0_11 = arith.constant 0 : index
      %14 = vector.load %arg4[%c0_10, %c0_11] : memref<16x128xf32, #tpu.memory_space<vmem>>, vector<16x128xf32>
      tpu.vector_store %arg4[%c0_10, %c0_11], %13 {strides = array<i32>} : memref<16x128xf32, #tpu.memory_space<vmem>>, vector<16x128xf32>,
    } else {
    }
    %c0 = arith.constant 0 : index
    %c0_1 = arith.constant 0 : index
    %3 = vector.load %arg1[%c0, %c0_1] : memref<16x128xf32, #tpu.memory_space<vmem>>, vector<16x128xf32>
    %c0_2 = arith.constant 0 : index
    %c0_3 = arith.constant 0 : index
    %4 = vector.load %arg2[%c0_2, %c0_3] : memref<16x128xf32, #tpu.memory_space<vmem>>, vector<16x128xf32>
    %5 = arith.subf %3, %4 : vector<16x128xf32>
    %6 = arith.mulf %5, %5 : vector<16x128xf32>
    %c0_4 = arith.constant 0 : index
    %c0_5 = arith.constant 0 : index
    %7 = vector.load %arg4[%c0_4, %c0_5] : memref<16x128xf32, #tpu.memory_space<vmem>>, vector<16x128xf32>
    %8 = arith.addf %7, %6 : vector<16x128xf32>
    %c0_6 = arith.constant 0 : index
    %c0_7 = arith.constant 0 : index
    %9 = vector.load %arg4[%c0_6, %c0_7] : memref<16x128xf32, #tpu.memory_space<vmem>>, vector<16x128xf32>
    tpu.vector_store %arg4[%c0_6, %c0_7], %8 {strides = array<i32>} : memref<16x128xf32, #tpu.memory_space<vmem>>, vector<16x128xf32>,
    %c0_i32_8 = arith.constant 0 : i32
    %10 = arith.cmpi eq, %arg0, %c0_i32_8 : i32
    %11 = arith.extui %10 : i1 to i32
    %c0_i32_9 = arith.constant 0 : i32
    %12 = arith.cmpi ne, %11, %c0_i32_9 : i32
    scf.if %12 {
      %c0_10 = arith.constant 0 : index
      %c0_11 = arith.constant 0 : index
      %13 = vector.load %arg4[%c0_10, %c0_11] : memref<16x128xf32, #tpu.memory_space<vmem>>, vector<16x128xf32>
      %cst = arith.constant dense<0.000000e+00> : vector<128xf32>
      %14 = vector.multi_reduction <add>, %13, %cst [0] : vector<16x128xf32> to vector<128xf32>
      %15 = vector.shape_cast %14 : vector<128xf32> to vector<1x128xf32>
      %c0_12 = arith.constant 0 : index
      %c0_13 = arith.constant 0 : index
      %16 = vector.load %arg3[%c0_12, %c0_13] : memref<1x128xf32, #tpu.memory_space<vmem>>, vector<1x128xf32>
      tpu.vector_store %arg3[%c0_12, %c0_13], %15 {strides = array<i32>} : memref<1x128xf32, #tpu.memory_space<vmem>>, vector<1x128xf32>,
    } else {
    }
    return
  }
  func.func @transform_0(%arg0: i32) -> (i32, i32) {
    %c0_i32 = arith.constant 0 : i32
    %c0_i32_0 = arith.constant 0 : i32
    return %arg0, %c0_i32 : i32, i32
  }
  func.func @transform_1(%arg0: i32) -> (i32, i32) {
    %c0_i32 = arith.constant 0 : i32
    %c0_i32_0 = arith.constant 0 : i32
    return %arg0, %c0_i32 : i32, i32
  }
  func.func @transform_2(%arg0: i32) -> (i32, i32) {
    %c0_i32 = arith.constant 0 : i32
    %c0_i32_0 = arith.constant 0 : i32
    %c0_i32_1 = arith.constant 0 : i32
    return %c0_i32, %c0_i32_0 : i32, i32
  }
}

</mosaic_0001>

<llo_original>
// kernel: tpu_custom_call.1
$region0: #{tpu_custom_call.1}
  #allocation0 [shape = 'u32[]', space=smem, size = 0x4, offset = 0x4, fixed_abs, tag = 'smem constant byte address 0x4 - core index']
  #allocation1 [shape = 'u32[72,128]{1,0:T(1,128)}', space=vmem, size = 0x9000, scoped, tag = 'internal scratch']
  #allocation2 [shape = 'f32[16,128]{1,0:T(8,128)}', space=vmem, size = 0x2000, scoped, tag = 'scratch operand']
  %s0 = inlined_call_operand.hbm [shape: f32[16,128], index: 0, kind: input, shape index: {}]
  %s1 = inlined_call_operand.hbm [shape: f32[16,128], index: 1, kind: input, shape index: {}]
  %s2 = inlined_call_operand.hbm [shape: f32[1,128], index: 2, kind: output, shape index: {}]
  %s3 = sld [smem:[#allocation0]]
  $region34: #{tpu_custom_call.1} parent=0
    _
  %s5 = ssub.s32 1, %s3
  %s6 = scalar_select 0, %s5, %s3
  $region1: #{tpu_custom_call.1} parent=0
    #allocation3 [shape = 'u8[8192]{0}', space=vmem, size = 0x2000, scoped, tag = 'input window, operand 0, single buffered']
    #allocation4 [shape = 's32[1]{0}', space=sflag, size = 0x4, scoped, tag = 'scoped memory for tpu_custom_call.1']
    #allocation5 [shape = 's32[1]{0}', space=sflag, size = 0x4, scoped, tag = 'scoped memory for tpu_custom_call.1']
    #allocation6 [shape = 'u8[8192]{0}', space=vmem, size = 0x2000, scoped, tag = 'input window, operand 1, single buffered']
    #allocation7 [shape = 's32[1]{0}', space=sflag, size = 0x4, scoped, tag = 'scoped memory for tpu_custom_call.1']
    #allocation8 [shape = 'u8[512]{0}', space=vmem, size = 0x400, scoped, tag = 'output window, operand 0, single buffered']
    %7 = vsyncpa [#allocation4], 0
    %8 = vsyncpa [#allocation7], 0
    %9 = vsyncpa [#allocation5], 0
    // Predicated region
    $region2: #{tpu_custom_call.1} parent=1 // pred_check
      _
    $region3: #{tpu_custom_call.1} parent=1 // pred_check_branch
      %11 = sbr.rel (0) target = $region5
    $region4: #{tpu_custom_call.1} parent=1 // pred_region
      %13 = vsyncadd [#allocation4], 0
      %s14 = sshll.u32 %s0, 4
      %s15 = int_to_ptr.hbm [resolvable:$true] %s14
      %s16 = sshll.u32 [#allocation3], 4
      %s17 = int_to_ptr.vmem [resolvable:$true] %s16
      %22 = dma.hbm_to_vmem [thread:$0]  %s15, 256, %s17, [#allocation4], 128, 128, 8
    $region5: #{tpu_custom_call.1} parent=1 // pred_fallthru
      _
    // Predicated region
    $region6: #{tpu_custom_call.1} parent=1 // pred_check
      _
    $region7: #{tpu_custom_call.1} parent=1 // pred_check_branch
      %24 = sbr.rel (0) target = $region9
    $region8: #{tpu_custom_call.1} parent=1 // pred_region
      %26 = vsyncadd [#allocation7], 0
      %s27 = sshll.u32 %s1, 4
      %s28 = int_to_ptr.hbm [resolvable:$true] %s27
      %s29 = sshll.u32 [#allocation6], 4
      %s30 = int_to_ptr.vmem [resolvable:$true] %s29
      %35 = dma.hbm_to_vmem [thread:$0]  %s28, 256, %s30, [#allocation7], 128, 128, 8
    $region9: #{tpu_custom_call.1} parent=1 // pred_fallthru
      _
    // Predicated region
    $region10: #{tpu_custom_call.1} parent=1 // pred_check
      _
    $region11: #{tpu_custom_call.1} parent=1 // pred_check_branch
      %37 = sbr.rel (0) target = $region13
    $region12: #{tpu_custom_call.1} parent=1 // pred_region
      %39 = dma.done [#allocation4], 256
    $region13: #{tpu_custom_call.1} parent=1 // pred_fallthru
      _
    // Predicated region
    $region14: #{tpu_custom_call.1} parent=1 // pred_check
      _
    $region15: #{tpu_custom_call.1} parent=1 // pred_check_branch
      %41 = sbr.rel (0) target = $region17
    $region16: #{tpu_custom_call.1} parent=1 // pred_region
      %43 = dma.done [#allocation7], 256
    $region17: #{tpu_custom_call.1} parent=1 // pred_fallthru
      _
    %p44 = scmp.eq.s32.totalorder 0, 0
    // Predicated region
    $region18: #{tpu_custom_call.1} parent=1 // pred_check
      %p45 = pneg %p44
    $region19: #{tpu_custom_call.1} parent=1 // pred_check_branch
      %47 = sbr.rel (%p45) target = $region21
    $region20: #{tpu_custom_call.1} parent=1 // pred_region
      %48 = vst [vmem:[#allocation2] sm:$0xff] 0.0
      %49 = vst [vmem:[#allocation2 + $0x8] sm:$0xff] 0.0
    $region21: #{tpu_custom_call.1} parent=1 // pred_fallthru
      _
    %v50 = vld [vmem:[#allocation3] sm:$0xff]
    %v51 = vld [vmem:[#allocation3 + $0x8] sm:$0xff]
    %v52 = vld [vmem:[#allocation6] sm:$0xff]
    %v53 = vld [vmem:[#allocation6 + $0x8] sm:$0xff]
    %v54 = vsub.f32 %v50, %v52
    %v55 = vsub.f32 %v51, %v53
    %v56 = vmul.f32 %v54, %v54
    %v57 = vmul.f32 %v55, %v55
    %v58 = vld [vmem:[#allocation2] sm:$0xff]
    %v59 = vld [vmem:[#allocation2 + $0x8] sm:$0xff]
    %v60 = vadd.f32 %v58, %v56
    %v61 = vadd.f32 %v59, %v57
    %62 = vst [vmem:[#allocation2] sm:$0xff] %v60
    %63 = vst [vmem:[#allocation2 + $0x8] sm:$0xff] %v61
    // Predicated region
    $region22: #{tpu_custom_call.1} parent=1 // pred_check
      %p64 = pneg %p44
    $region23: #{tpu_custom_call.1} parent=1 // pred_check_branch
      %66 = sbr.rel (%p64) target = $region25
    $region24: #{tpu_custom_call.1} parent=1 // pred_region
      %v67 = vld [vmem:[#allocation2] sm:$0xff]
      %v68 = vld [vmem:[#allocation2 + $0x8] sm:$0xff]
      %v69 = vadd.f32 %v67, %v68
      %v70 = vrot.slane %v69, 4
      %v71 = vadd.f32 %v69, %v70
      %v72 = vrot.slane %v71, 2
      %v73 = vadd.f32 %v71, %v72
      %v74 = vrot.slane %v73, 1
      %v75 = vadd.f32 %v73, %v74
      %76 = vst [vmem:[#allocation8] sm:$0x1] %v75
    $region25: #{tpu_custom_call.1} parent=1 // pred_fallthru
      _
    // Predicated region
    $region26: #{tpu_custom_call.1} parent=1 // pred_check
      _
    $region27: #{tpu_custom_call.1} parent=1 // pred_check_branch
      %78 = sbr.rel (0) target = $region29
    $region28: #{tpu_custom_call.1} parent=1 // pred_region
      %80 = vsyncadd [#allocation5], 0
      %s82 = sshll.u32 [#allocation8], 4
      %s83 = int_to_ptr.vmem [resolvable:$true] %s82
      %s84 = sshll.u32 %s2, 4
      %s85 = int_to_ptr.hbm [resolvable:$true] %s84
      %87 = dma.vmem_to_hbm [thread:$0]  %s83, 16, %s85, [#allocation5]
    $region29: #{tpu_custom_call.1} parent=1 // pred_fallthru
      _
    // Predicated region
    $region30: #{tpu_custom_call.1} parent=1 // pred_check
      _
    $region31: #{tpu_custom_call.1} parent=1 // pred_check_branch
      %89 = sbr.rel (0) target = $region33
    $region32: #{tpu_custom_call.1} parent=1 // pred_region
      %91 = dma.done [#allocation5], 16
    $region33: #{tpu_custom_call.1} parent=1 // pred_fallthru
      _
    %92 = vsyncpa [#allocation4], 1
    %93 = vsyncpa [#allocation7], 1
    %94 = vsyncpa [#allocation5], 1

</llo_original>
